<compile_context>
chip_gen: v6e
topology: v6e:2x2x1
jax: 0.10.0
libtpu: 0.0.40
codegen_flags: <defaults>
</compile_context>

<pallas_src>
import math

import jax
import jax.numpy as jnp
from jax.experimental import pallas as pl
from jax.experimental.pallas import tpu as pltpu


# ----------------------------------------------------------------------------
# small helpers
# ----------------------------------------------------------------------------
def _round_up(x, m):
    return ((x + m - 1) // m) * m


def _compiler_params(sem, block_bytes):
    # double-buffered blocks + headroom, clamped to a window that is safe on
    # v5e/v6e (128 MiB physical) and v7x (64 MiB physical).
    need = int(2 * block_bytes + (8 << 20))
    limit = int(min(max(need, 32 << 20), 64 << 20))
    return pltpu.CompilerParams(dimension_semantics=sem, vmem_limit_bytes=limit)


def _layernorm(z, w, b, eps=1e-6):
    mu = jnp.mean(z, axis=-1, keepdims=True)
    var = jnp.mean(jnp.square(z - mu), axis=-1, keepdims=True)
    return (z - mu) * jax.lax.rsqrt(var + eps) * w + b


# ----------------------------------------------------------------------------
# Pallas kernels
# ----------------------------------------------------------------------------
def _linear_kernel(x_ref, w_ref, b_ref, o_ref):
    x = x_ref[...].astype(jnp.bfloat16)                       # bf16 MXU inputs
    o_ref[...] = (
        jnp.dot(x, w_ref[...], preferred_element_type=jnp.float32) + b_ref[...]
    )


def pallas_linear(x2d, w, b):
    """x2d: (M, Din) f32, w: (Din, Dout) bf16, b: (1, Dout) f32 -> (M, Dout) f32."""
    M, Din = x2d.shape
    Dout = w.shape[1]
    TM = min(256, _round_up(M, 8))                            # token-row tile
    Mp = _round_up(M, TM)
    if Mp != M:
        x2d = jnp.pad(x2d, ((0, Mp - M), (0, 0)))
    block_bytes = 4 * TM * (Din + Dout) + 2 * Din * Dout + 4 * Dout
    out = pl.pallas_call(
        _linear_kernel,
        out_shape=jax.ShapeDtypeStruct((Mp, Dout), jnp.float32),
        grid=(Mp // TM,),
        in_specs=[
            pl.BlockSpec((TM, Din), lambda i: (i, 0)),
            pl.BlockSpec((Din, Dout), lambda i: (0, 0)),
            pl.BlockSpec((1, Dout), lambda i: (0, 0)),
        ],
        out_specs=pl.BlockSpec((TM, Dout), lambda i: (i, 0)),
        compiler_params=_compiler_params(("parallel",), block_bytes),
    )(x2d, w, b)
    return out[:M]


def _norm_linear_kernel(x_ref, lnw_ref, lnb_ref, w_ref, b_ref, o_ref):
    z = _layernorm(x_ref[...], lnw_ref[...], lnb_ref[...])    # f32 stats
    o_ref[...] = (
        jnp.dot(z.astype(jnp.bfloat16), w_ref[...],
                preferred_element_type=jnp.float32) + b_ref[...]
    )


def pallas_norm_linear(x2d, lnw, lnb, w, b):
    """Final LayerNorm fused with output projection. x2d: (M, D)."""
    M, D = x2d.shape
    Dout = w.shape[1]
    TM = min(256, _round_up(M, 8))
    Mp = _round_up(M, TM)
    if Mp != M:
        x2d = jnp.pad(x2d, ((0, Mp - M), (0, 0)))
    block_bytes = 4 * TM * (D + Dout) + 2 * D * Dout + 4 * (Dout + 2 * D)
    out = pl.pallas_call(
        _norm_linear_kernel,
        out_shape=jax.ShapeDtypeStruct((Mp, Dout), jnp.float32),
        grid=(Mp // TM,),
        in_specs=[
            pl.BlockSpec((TM, D), lambda i: (i, 0)),
            pl.BlockSpec((1, D), lambda i: (0, 0)),
            pl.BlockSpec((1, D), lambda i: (0, 0)),
            pl.BlockSpec((D, Dout), lambda i: (0, 0)),
            pl.BlockSpec((1, Dout), lambda i: (0, 0)),
        ],
        out_specs=pl.BlockSpec((TM, Dout), lambda i: (i, 0)),
        compiler_params=_compiler_params(("parallel",), block_bytes),
    )(x2d, lnw, lnb, w, b)
    return out[:M]


def _make_blocks_kernel(num_heads, head_dim, embed_dim, n_real, n_pad, bt):
    """All transformer blocks fused: grid = (batch_tiles, depth)."""
    scale = float(head_dim) ** -0.5
    D = embed_dim
    M = bt * n_pad                # MXU M dimension per grid step
    HB = num_heads * bt           # merged (head, sequence) batch for attention

    def kernel(x_ref, ln1w, ln1b, qkvw, qkvb, projw, projb, g1,
               ln2w, ln2b, fc1w, fc1b, fc2w, fc2b, g2, o_ref, acc_ref):
        layer = pl.program_id(1)
        n_layers = pl.num_programs(1)

        # running residual state lives in VMEM scratch across the layer axis
        @pl.when(layer == 0)
        def _():
            acc_ref[...] = x_ref[...]

        x = acc_ref[...].reshape(M, D)                        # (M, D) f32

        # ---- attention branch -------------------------------------------
        h = _layernorm(x, ln1w[0], ln1b[0])
        qkv = (jnp.dot(h.astype(jnp.bfloat16), qkvw[0],
                       preferred_element_type=jnp.float32) + qkvb[0])   # (M, 3D)
        qkv = qkv.reshape(bt, n_pad, 3 * D)

        def split_heads(base):
            # head-major stack along the leading axis: (H*bt, N, head_dim)
            parts = [
                qkv[:, :, base + hh * head_dim: base + (hh + 1) * head_dim]
                for hh in range(num_heads)
            ]
            return jnp.concatenate(parts, axis=0).astype(jnp.bfloat16)

        q = split_heads(0)
        k = split_heads(D)
        v = split_heads(2 * D)

        # batched attention over all heads & sequences in one MXU push
        s = jnp.einsum("znd,zmd->znm", q, k,
                       preferred_element_type=jnp.float32) * scale      # (HB,N,N)
        if n_real < n_pad:
            keep = jax.lax.broadcasted_iota(jnp.int32, (1, 1, n_pad), 2) < n_real
            s = jnp.where(keep, s, jnp.float32(-1e30))        # mask padded keys
        s = s - jnp.max(s, axis=-1, keepdims=True)
        e = jnp.exp(s)
        p_attn = e * pl.reciprocal(jnp.sum(e, axis=-1, keepdims=True), approx=True)

        ctx = jnp.einsum("znm,zmd->znd", p_attn.astype(jnp.bfloat16), v,
                         preferred_element_type=jnp.float32)  # (HB, N, hd)
        attn = jnp.concatenate(
            [ctx[hh * bt:(hh + 1) * bt] for hh in range(num_heads)], axis=-1
        ).reshape(M, D)                                       # heads back to lanes
        attn = (jnp.dot(attn.astype(jnp.bfloat16), projw[0],
                        preferred_element_type=jnp.float32) + projb[0])
        x = x + g1[0] * attn                                  # LayerScale residual

        # ---- MLP branch ----------------------------------------------------
        h2 = _layernorm(x, ln2w[0], ln2b[0])
        m = (jnp.dot(h2.astype(jnp.bfloat16), fc1w[0],
                     preferred_element_type=jnp.float32) + fc1b[0])
        m = jax.nn.gelu(m, approximate=False)                 # exact, matches nn.GELU
        m = (jnp.dot(m.astype(jnp.bfloat16), fc2w[0],
                     preferred_element_type=jnp.float32) + fc2b[0])
        x = x + g2[0] * m

        acc_ref[...] = x.reshape(bt, n_pad, D)

        @pl.when(layer == n_layers - 1)
        def _():
            o_ref[...] = acc_ref[...]

    return kernel


def pallas_blocks(x, blk, num_heads, n_real):
    """All transformer blocks in a single pallas_call.

    x: (B, n_pad, D) f32 (n_pad % 8 == 0); blk: layer-stacked params.
    """
    B, n_pad, D = x.shape
    L = blk["qkv_w"].shape[0]
    Hm = blk["fc1_w"].shape[-1]
    head_dim = D // num_heads

    # several sequences per grid step so the matmul M dim is ~256 token rows
    bt = max(1, min(B, max(1, 256 // n_pad)))
    Bp = _round_up(B, bt)
    if Bp != B:
        x = jnp.pad(x, ((0, Bp - B), (0, 0), (0, 0)))

    kernel = _make_blocks_kernel(num_heads, head_dim, D, n_real, n_pad, bt)

    def wspec(r, c):
        # layer-stacked parameter: block (1, r, c), indexed by the layer axis
        return pl.BlockSpec((1, r, c), lambda b, l: (l, 0, 0))

    in_specs = [
        pl.BlockSpec((bt, n_pad, D), lambda b, l: (b, 0, 0)),   # tokens
        wspec(1, D), wspec(1, D),                               # ln1 w,b
        wspec(D, 3 * D), wspec(1, 3 * D),                       # qkv w,b
        wspec(D, D), wspec(1, D),                               # proj w,b
        wspec(1, D),                                            # gamma1
        wspec(1, D), wspec(1, D),                               # ln2 w,b
        wspec(D, Hm), wspec(1, Hm),                             # fc1 w,b
        wspec(Hm, D), wspec(1, D),                              # fc2 w,b
        wspec(1, D),                                            # gamma2
    ]

    # rough per-step footprint: f32 x/out/scratch blocks + bf16 weight set
    block_bytes = (4 * 3 * bt * n_pad * D
                   + 2 * (3 * D * D + D * D + 2 * D * Hm)
                   + 4 * (10 * D + Hm))

    out = pl.pallas_call(
        kernel,
        out_shape=jax.ShapeDtypeStruct((Bp, n_pad, D), jnp.float32),
        grid=(Bp // bt, L),                                    # layers innermost
        in_specs=in_specs,
        out_specs=pl.BlockSpec((bt, n_pad, D), lambda b, l: (b, 0, 0)),
        scratch_shapes=[pltpu.VMEM((bt, n_pad, D), jnp.float32)],
        compiler_params=_compiler_params(("parallel", "arbitrary"), block_bytes),
    )(x, blk["ln1_w"], blk["ln1_b"], blk["qkv_w"], blk["qkv_b"],
      blk["proj_w"], blk["proj_b"], blk["gamma1"],
      blk["ln2_w"], blk["ln2_b"], blk["fc1_w"], blk["fc1_b"],
      blk["fc2_w"], blk["fc2_b"], blk["gamma2"])
    return out[:B]


# ----------------------------------------------------------------------------
# Plain-JAX glue
# ----------------------------------------------------------------------------
def sincos_pos_embed_2d(embed_dim, gh, gw):
    """Standard 2D sin-cos positional embedding, shape (gh*gw, embed_dim)."""
    # TODO(synk): exact SinusoidalEmbed parameterization from tactile_ssl is not
    # available in the prompt; standard 2D sin-cos (I-JEPA style) is used.
    def embed_1d(dim, pos):
        omega = jnp.arange(dim // 2, dtype=jnp.float32)
        omega = 1.0 / (10000.0 ** (omega / (dim / 2.0)))
        out = pos[:, None] * omega[None, :]
        return jnp.concatenate([jnp.sin(out), jnp.cos(out)], axis=1)

    grid_w, grid_h = jnp.meshgrid(
        jnp.arange(gw, dtype=jnp.float32), jnp.arange(gh, dtype=jnp.float32)
    )
    emb_h = embed_1d(embed_dim // 2, grid_h.reshape(-1))
    emb_w = embed_1d(embed_dim // 2, grid_w.reshape(-1))
    return jnp.concatenate([emb_h, emb_w], axis=1).astype(jnp.float32)


def apply_masks(x, masks):
    """x: (B, N, C); masks: list of (B, K) int32 keep-indices -> (len*B, K, C)."""
    gathered = [jnp.take_along_axis(x, m[:, :, None], axis=1) for m in masks]
    return jnp.concatenate(gathered, axis=0)


def predictor_forward(x, context_masks, masks, params, mask_index=1):
    b, num_context_tokens, c = x.shape
    p = len(context_masks)
    k = len(masks)
    batch_size = b // p
    D = params["pos_embed"].shape[-1]
    din_pad = params["inp_w"].shape[0]

    # input projection (Pallas, token-parallel, Din zero-padded to 128 lanes)
    if c < din_pad:
        x = jnp.pad(x, ((0, 0), (0, 0), (0, din_pad - c)))
    x = pallas_linear(x.reshape(b * num_context_tokens, din_pad),
                      params["inp_w"], params["inp_b"])
    x = x.reshape(b, num_context_tokens, D)

    # positional embeddings
    pos = params["pos_embed"]                                     # (num_patches, D)
    pos_b = jnp.broadcast_to(pos[None], (batch_size,) + pos.shape)
    x = x + apply_masks(pos_b, context_masks)                     # (p*B, Nc, D)

    pos_masked = apply_masks(pos_b, masks)                        # (k*B, Np, D)
    pos_masked = jnp.tile(pos_masked, (p, 1, 1))                  # (p*k*B, Np, D)

    mask_token = params["mask_tokens"][mask_index % len(params["mask_tokens"])]
    prediction_tokens = mask_token[None, :, :] + pos_masked       # broadcast (1, D)

    # repeat '(p b) n c -> (p k b) n c'
    Nc = x.shape[1]
    x = x.reshape(p, batch_size, Nc, D)
    x = jnp.broadcast_to(x[:, None], (p, k, batch_size, Nc, D))
    x = x.reshape(p * k * batch_size, Nc, D)

    x = jnp.concatenate([x, prediction_tokens], axis=1)           # (B, Ntot, D)

    # transformer blocks (single fused Pallas call over all layers)
    B, Ntot, _ = x.shape
    n_pad = _round_up(Ntot, 8)                                    # sublane padding
    if n_pad != Ntot:
        x = jnp.pad(x, ((0, 0), (0, n_pad - Ntot), (0, 0)))
    x = pallas_blocks(x, params["blocks"], params["num_heads"], n_real=Ntot)

    # final norm + slice + output projection (LayerNorm is per-token so slicing
    # before the fused norm+linear is equivalent to norm-then-slice)
    xp = x[:, num_context_tokens:Ntot]                            # (B, Np, D)
    Bo, Npred, _ = xp.shape
    out2 = pallas_norm_linear(xp.reshape(Bo * Npred, D),
                              params["norm_w"], params["norm_b"],
                              params["out_w"], params["out_b"])   # (.., Dout_pad)
    out = out2[:, :params["input_dim"]].reshape(Bo, Npred, params["input_dim"])
    return out


# ----------------------------------------------------------------------------
# Deterministic parameter construction (bf16 matmul weights, layer-stacked)
# ----------------------------------------------------------------------------
def trunc_normal(key, shape, std=0.02):
    return (std * jax.random.truncated_normal(key, -2.0, 2.0, shape)).astype(jnp.float32)


def make_params(key, input_dim, embed_dim, depth, num_heads, mlp_ratio,
                num_patches_grid, num_mask_tokens=1):
    gh, gw = num_patches_grid
    D = embed_dim
    hidden = int(embed_dim * mlp_ratio)
    din_pad = _round_up(input_dim, 128)
    dout_pad = _round_up(input_dim, 128)

    keys = jax.random.split(key, 8 + depth * 4)
    ki = iter(keys)

    # zero-padded projection weights (padding contributes exactly zero)
    inp_w = jnp.zeros((din_pad, D), jnp.float32).at[:input_dim].set(
        trunc_normal(next(ki), (input_dim, D)))
    out_w = jnp.zeros((D, dout_pad), jnp.float32).at[:, :input_dim].set(
        trunc_normal(next(ki), (D, input_dim)))

    params = {
        "num_heads": num_heads,
        "input_dim": input_dim,
        "pos_embed": sincos_pos_embed_2d(D, gh, gw),
        "inp_w": inp_w.astype(jnp.bfloat16),
        "inp_b": jnp.zeros((1, D), jnp.float32),
        "out_w": out_w.astype(jnp.bfloat16),
        "out_b": jnp.zeros((1, dout_pad), jnp.float32),
        "norm_w": jnp.ones((1, D), jnp.float32),
        "norm_b": jnp.zeros((1, D), jnp.float32),
    }
    # nn.ParameterList([Parameter]*num_mask_tokens) shares one tensor
    mt = trunc_normal(next(ki), (1, D))
    params["mask_tokens"] = [mt] * num_mask_tokens

    qkv_w, proj_w, fc1_w, fc2_w = [], [], [], []
    for layer_id in range(1, depth + 1):
        rescale = 1.0 / math.sqrt(2.0 * layer_id)   # _rescale_blocks
        qkv_w.append(trunc_normal(next(ki), (D, 3 * D)))
        proj_w.append(trunc_normal(next(ki), (D, D)) * rescale)
        fc1_w.append(trunc_normal(next(ki), (D, hidden)))
        fc2_w.append(trunc_normal(next(ki), (hidden, D)) * rescale)

    L = depth
    params["blocks"] = {
        "ln1_w": jnp.ones((L, 1, D), jnp.float32),
        "ln1_b": jnp.zeros((L, 1, D), jnp.float32),
        "qkv_w": jnp.stack(qkv_w).astype(jnp.bfloat16),
        "qkv_b": jnp.zeros((L, 1, 3 * D), jnp.float32),
        "proj_w": jnp.stack(proj_w).astype(jnp.bfloat16),
        "proj_b": jnp.zeros((L, 1, D), jnp.float32),
        "gamma1": jnp.ones((L, 1, D), jnp.float32),   # LayerScale init_values=1
        "ln2_w": jnp.ones((L, 1, D), jnp.float32),
        "ln2_b": jnp.zeros((L, 1, D), jnp.float32),
        "fc1_w": jnp.stack(fc1_w).astype(jnp.bfloat16),
        "fc1_b": jnp.zeros((L, 1, hidden), jnp.float32),
        "fc2_w": jnp.stack(fc2_w).astype(jnp.bfloat16),
        "fc2_b": jnp.zeros((L, 1, D), jnp.float32),
        "gamma2": jnp.ones((L, 1, D), jnp.float32),
    }
    return params


# ----------------------------------------------------------------------------
# Main
# ----------------------------------------------------------------------------
if __name__ == "__main__":
    # small config consistent with the module (lane-aligned embed/hidden dims)
    input_dim = 64          # encoder embedding dim fed into the predictor
    embed_dim = 128
    depth = 2
    num_heads = 4
    mlp_ratio = 4.0
    img_size, patch_size = 16, 4
    gh = gw = img_size // patch_size
    num_patches = gh * gw   # 16

    batch_size = 2
    p = 1                   # len(context_masks)
    k = 2                   # len(masks)
    Nc = 8                  # context tokens kept per sample
    Np = 4                  # predicted tokens per mask (Ntot=12 -> padded to 16)

    root = jax.random.PRNGKey(0)
    k_params, k_x, k_masks = jax.random.split(root, 3)

    params = make_params(k_params, input_dim, embed_dim, depth, num_heads,
                         mlp_ratio, (gh, gw), num_mask_tokens=1)

    # deterministic keep-index masks
    def make_mask_list(base_key, n_masks, keep):
        out = []
        for mi in range(n_masks):
            rows = []
            for bb in range(batch_size):
                kk = jax.random.fold_in(base_key, mi * 100 + bb)
                rows.append(jax.random.permutation(kk, num_patches)[:keep])
            out.append(jnp.stack(rows).astype(jnp.int32))
        return out

    context_masks = make_mask_list(jax.random.fold_in(k_masks, 0), p, Nc)
    masks = make_mask_list(jax.random.fold_in(k_masks, 1), k, Np)

    x = jax.random.normal(k_x, (batch_size * p, Nc, input_dim), jnp.float32)

    out = predictor_forward(x, context_masks, masks, params, mask_index=1)
    out = jax.block_until_ready(out)

    expected = (p * k * batch_size, Np, input_dim)
    assert out.shape == expected, (out.shape, expected)
    assert out.dtype == jnp.float32
    assert bool(jnp.all(jnp.isfinite(out)))
    print("KERNEL_OK")
</pallas_src>

<mosaic_0001>
module attributes {stable_mosaic.version = 11 : i64} {
  func.func @_linear_kernel(%arg0: i32, %arg1: memref<16x128xf32, #tpu.memory_space<vmem>>, %arg2: memref<128x128xbf16, #tpu.memory_space<vmem>>, %arg3: memref<1x128xf32, #tpu.memory_space<vmem>>, %arg4: memref<16x128xf32, #tpu.memory_space<vmem>>) attributes {dimension_semantics = [#tpu.dimension_semantics<parallel>], iteration_bounds = array<i64: 1>, scalar_prefetch = 0 : i64, scratch_operands = 0 : i64, tpu.core_type = #tpu.core_type<tc>, window_params = [{transform_indices = @transform_0, window_bounds = array<i64: 16, 128>}, {pipeline_mode = #tpu.pipeline_mode<synchronous>, transform_indices = @transform_1, window_bounds = array<i64: 128, 128>}, {pipeline_mode = #tpu.pipeline_mode<synchronous>, transform_indices = @transform_2, window_bounds = array<i64: 1, 128>}, {transform_indices = @transform_3, window_bounds = array<i64: 16, 128>}]} {
    %c0 = arith.constant 0 : index
    %c0_0 = arith.constant 0 : index
    %0 = vector.load %arg1[%c0, %c0_0] : memref<16x128xf32, #tpu.memory_space<vmem>>, vector<16x128xf32>
    %1 = arith.truncf %0 : vector<16x128xf32> to vector<16x128xbf16>
    %c0_1 = arith.constant 0 : index
    %c0_2 = arith.constant 0 : index
    %2 = vector.load %arg2[%c0_1, %c0_2] : memref<128x128xbf16, #tpu.memory_space<vmem>>, vector<128x128xbf16>
    %cst = arith.constant dense<0.000000e+00> : vector<16x128xf32>
    %3 = tpu.matmul %1, %2, %cst {dimension_numbers = #tpu.dot_dimension_numbers<[1], [0], [0], [1], [0, 0, 1, 1], [], []>} : vector<16x128xbf16>, vector<128x128xbf16>, vector<16x128xf32> -> vector<16x128xf32>
    %c0_3 = arith.constant 0 : index
    %c0_4 = arith.constant 0 : index
    %4 = vector.load %arg3[%c0_3, %c0_4] : memref<1x128xf32, #tpu.memory_space<vmem>>, vector<1x128xf32>
    %5 = vector.broadcast %4 : vector<1x128xf32> to vector<16x128xf32>
    %6 = arith.addf %3, %5 : vector<16x128xf32>
    %c0_5 = arith.constant 0 : index
    %c0_6 = arith.constant 0 : index
    %7 = vector.load %arg4[%c0_5, %c0_6] : memref<16x128xf32, #tpu.memory_space<vmem>>, vector<16x128xf32>
    tpu.vector_store %arg4[%c0_5, %c0_6], %6 {strides = array<i32>} : memref<16x128xf32, #tpu.memory_space<vmem>>, vector<16x128xf32>,
    return
  }
  func.func @transform_0(%arg0: i32) -> (i32, i32) {
    %c0_i32 = arith.constant 0 : i32
    %c0_i32_0 = arith.constant 0 : i32
    return %arg0, %c0_i32 : i32, i32
  }
  func.func @transform_1(%arg0: i32) -> (i32, i32) {
    %c0_i32 = arith.constant 0 : i32
    %c0_i32_0 = arith.constant 0 : i32
    %c0_i32_1 = arith.constant 0 : i32
    return %c0_i32, %c0_i32_0 : i32, i32
  }
  func.func @transform_2(%arg0: i32) -> (i32, i32) {
    %c0_i32 = arith.constant 0 : i32
    %c0_i32_0 = arith.constant 0 : i32
    %c0_i32_1 = arith.constant 0 : i32
    return %c0_i32, %c0_i32_0 : i32, i32
  }
  func.func @transform_3(%arg0: i32) -> (i32, i32) {
    %c0_i32 = arith.constant 0 : i32
    %c0_i32_0 = arith.constant 0 : i32
    return %arg0, %c0_i32 : i32, i32
  }
}

</mosaic_0001>

<llo_original>
// kernel: tpu_custom_call.1
$region0: #{tpu_custom_call.1}
  #allocation0 [shape = 'u32[]', space=smem, size = 0x4, offset = 0x4, fixed_abs, tag = 'smem constant byte address 0x4 - core index']
  #allocation1 [shape = 'u32[144,128]{1,0:T(1,128)}', space=vmem, size = 0x12000, scoped, tag = 'internal scratch']
  %s0 = inlined_call_operand.hbm [shape: f32[16,128], index: 0, kind: input, shape index: {}]
  %s1 = inlined_call_operand.hbm [shape: bf16[128,128], index: 1, kind: input, shape index: {}]
  %s2 = inlined_call_operand.vmem [shape: f32[1,128], index: 2, kind: input, shape index: {}]
  %s3 = inlined_call_operand.hbm [shape: f32[16,128], index: 3, kind: output, shape index: {}]
  %s4 = sld [smem:[#allocation0]]
  $region30: #{tpu_custom_call.1} parent=0
    _
  %s6 = ssub.s32 1, %s4
  %s7 = scalar_select 0, %s6, %s4
  $region1: #{tpu_custom_call.1} parent=0
    #allocation2 [shape = 'u8[8192]{0}', space=vmem, size = 0x2000, scoped, tag = 'input window, operand 0, single buffered']
    #allocation3 [shape = 's32[1]{0}', space=sflag, size = 0x4, scoped, tag = 'scoped memory for tpu_custom_call.1']
    #allocation4 [shape = 's32[1]{0}', space=sflag, size = 0x4, scoped, tag = 'scoped memory for tpu_custom_call.1']
    #allocation5 [shape = 'u8[32768]{0}', space=vmem, size = 0x8000, scoped, tag = 'input window, operand 1, single buffered']
    #allocation6 [shape = 's32[1]{0}', space=sflag, size = 0x4, scoped, tag = 'scoped memory for tpu_custom_call.1']
    #allocation7 [shape = 'u8[8192]{0}', space=vmem, size = 0x2000, scoped, tag = 'output window, operand 0, single buffered']
    %8 = vsyncpa [#allocation3], 0
    %9 = vsyncpa [#allocation6], 0
    %10 = vsyncpa [#allocation4], 0
    // Predicated region
    $region2: #{tpu_custom_call.1} parent=1 // pred_check
      _
    $region3: #{tpu_custom_call.1} parent=1 // pred_check_branch
      %12 = sbr.rel (0) target = $region5
    $region4: #{tpu_custom_call.1} parent=1 // pred_region
      %s14 = ssub.s32 256, 256
      %15 = vsyncadd [#allocation3], %s14
      %s16 = sshll.u32 [#allocation2], 4
      %s17 = int_to_ptr.vmem [resolvable:$true] %s16
      %22 = dma.hbm_to_vmem [thread:$0]  %s0, 256, %s17, [#allocation3], 128, 128, 8
    $region5: #{tpu_custom_call.1} parent=1 // pred_fallthru
      _
    // Predicated region
    $region6: #{tpu_custom_call.1} parent=1 // pred_check
      _
    $region7: #{tpu_custom_call.1} parent=1 // pred_check_branch
      %24 = sbr.rel (0) target = $region9
    $region8: #{tpu_custom_call.1} parent=1 // pred_region
      %s26 = ssub.s32 1024, 1024
      %27 = vsyncadd [#allocation6], %s26
      %s28 = sshll.u32 [#allocation5], 4
      %s29 = int_to_ptr.vmem [resolvable:$true] %s28
      %34 = dma.hbm_to_vmem [thread:$0]  %s1, 1024, %s29, [#allocation6], 64, 64, 4
    $region9: #{tpu_custom_call.1} parent=1 // pred_fallthru
      _
    // Predicated region
    $region10: #{tpu_custom_call.1} parent=1 // pred_check
      _
    $region11: #{tpu_custom_call.1} parent=1 // pred_check_branch
      %36 = sbr.rel (0) target = $region13
    $region12: #{tpu_custom_call.1} parent=1 // pred_region
      _
    $region13: #{tpu_custom_call.1} parent=1 // pred_fallthru
      _
    // Predicated region
    $region14: #{tpu_custom_call.1} parent=1 // pred_check
      _
    $region15: #{tpu_custom_call.1} parent=1 // pred_check_branch
      %38 = sbr.rel (0) target = $region17
    $region16: #{tpu_custom_call.1} parent=1 // pred_region
      %39 = dma.done [#allocation3], 256
    $region17: #{tpu_custom_call.1} parent=1 // pred_fallthru
      _
    // Predicated region
    $region18: #{tpu_custom_call.1} parent=1 // pred_check
      _
    $region19: #{tpu_custom_call.1} parent=1 // pred_check_branch
      %41 = sbr.rel (0) target = $region21
    $region20: #{tpu_custom_call.1} parent=1 // pred_region
      %42 = dma.done [#allocation6], 1024
    $region21: #{tpu_custom_call.1} parent=1 // pred_fallthru
      _
    %v44 = vld [vmem:[#allocation2] sm:$0xff]
    %v45 = vld [vmem:[#allocation2 + $0x8] sm:$0xff]
    %v46 = vpack.c.bf16 %v45, %v44
    %v47 = vld [vmem:[#allocation5] sm:$0xf]
    %v48 = vld [vmem:[#allocation5 + $0x4] sm:$0xf]
    %v49 = vld [vmem:[#allocation5 + $0x8] sm:$0xf]
    %v50 = vld [vmem:[#allocation5 + $0xc] sm:$0xf]
    %v51 = vld [vmem:[#allocation5 + $0x10] sm:$0xf]
    %v52 = vld [vmem:[#allocation5 + $0x14] sm:$0xf]
    %v53 = vld [vmem:[#allocation5 + $0x18] sm:$0xf]
    %v54 = vld [vmem:[#allocation5 + $0x1c] sm:$0xf]
    %v55 = vld [vmem:[#allocation5 + $0x20] sm:$0xf]
    %v56 = vld [vmem:[#allocation5 + $0x24] sm:$0xf]
    %v57 = vld [vmem:[#allocation5 + $0x28] sm:$0xf]
    %v58 = vld [vmem:[#allocation5 + $0x2c] sm:$0xf]
    %v59 = vld [vmem:[#allocation5 + $0x30] sm:$0xf]
    %v60 = vld [vmem:[#allocation5 + $0x34] sm:$0xf]
    %v61 = vld [vmem:[#allocation5 + $0x38] sm:$0xf]
    %v62 = vld [vmem:[#allocation5 + $0x3c] sm:$0xf]
    %v63 = vld [vmem:[%s2] sm:$0x1]
    %v65 = vlaneseq
    %v66 = vshrl.u32 %v65, 7
    %v67 = vsub.s32 0, %v66
    %v68 = vrot.slane %v63, %v67
    %v86 = vunpack.c.l.b16 %v47
    %v87 = vunpack.c.l.b16 %v48
    %v88 = vunpack.c.l.b16 %v49
    %v89 = vunpack.c.l.b16 %v50
    %v90 = vunpack.c.l.b16 %v51
    %v91 = vunpack.c.l.b16 %v52
    %v92 = vunpack.c.l.b16 %v53
    %v93 = vunpack.c.l.b16 %v54
    %v94 = vunpack.c.l.b16 %v55
    %v95 = vunpack.c.l.b16 %v56
    %v96 = vunpack.c.l.b16 %v57
    %v97 = vunpack.c.l.b16 %v58
    %v98 = vunpack.c.l.b16 %v59
    %v99 = vunpack.c.l.b16 %v60
    %v100 = vunpack.c.l.b16 %v61
    %v101 = vunpack.c.l.b16 %v62
    %v102 = vpack.c.b16 %v87, %v86
    %v103 = vpack.c.b16 %v89, %v88
    %v104 = vpack.c.b16 %v91, %v90
    %v105 = vpack.c.b16 %v93, %v92
    %v106 = vpack.c.b16 %v95, %v94
    %v107 = vpack.c.b16 %v97, %v96
    %v108 = vpack.c.b16 %v99, %v98
    %v109 = vpack.c.b16 %v101, %v100
    %118 = vmatprep.subr.bf16.mxu0 0
    %119 = vmatpush1.bf16.msra.mxu0 %v109
    %120 = vmatprep.subr.bf16.mxu0 0
    %121 = vmatpush1.bf16.msra.mxu0 %v108
    %122 = vmatprep.subr.bf16.mxu0 0
    %123 = vmatpush1.bf16.msra.mxu0 %v107
    %124 = vmatprep.subr.bf16.mxu0 0
    %125 = vmatpush1.bf16.msra.mxu0 %v106
    %126 = vmatprep.subr.bf16.mxu0 0
    %127 = vmatpush1.bf16.msra.mxu0 %v105
    %128 = vmatprep.subr.bf16.mxu0 0
    %129 = vmatpush1.bf16.msra.mxu0 %v104
    %130 = vmatprep.subr.bf16.mxu0 0
    %131 = vmatpush1.bf16.msra.mxu0 %v103
    %132 = vmatprep.subr.bf16.mxu0 0
    %133 = vmatpush1.bf16.msra.mxu0 %v102
    %134 = vmatprep.subr.bf16.mxu0 0
    %135 = vmatpush2.bf16.msra.mxu0 0
    %136 = vmatprep.subr.bf16.mxu0 0
    %137 = vmatpush2.bf16.msra.mxu0 0
    %138 = vmatprep.subr.bf16.mxu0 0
    %139 = vmatpush2.bf16.msra.mxu0 0
    %140 = vmatprep.subr.bf16.mxu0 0
    %141 = vmatpush2.bf16.msra.mxu0 0
    %142 = vmatprep.subr.bf16.mxu0 0
    %143 = vmatpush2.bf16.msra.mxu0 0
    %144 = vmatprep.subr.bf16.mxu0 0
    %145 = vmatpush2.bf16.msra.mxu0 0
    %146 = vmatprep.subr.bf16.mxu0 0
    %147 = vmatpush2.bf16.msra.mxu0 0
    %148 = vmatprep.subr.bf16.mxu0 0
    %149 = vmatpush2.bf16.msra.mxu0 0
    %150 = vmatprep.mubr.bf16.mxu0 0
    %151 = vmatmul.mubr.bf16.gmra.mxu0 %v46
    %v152 = vpop.f32.mrf.mxu0
    %v153 = vadd.f32 %v68, %v152
    %v154 = vpop.f32.mrf.mxu0
    %v155 = vpop.f32.mrf.mxu0
    %v156 = vadd.f32 %v68, %v155
    %v157 = vpop.f32.mrf.mxu0
    %158 = vdwg.mxu0
    %159 = vst [vmem:[#allocation7] sm:$0xff] %v153
    %160 = vst [vmem:[#allocation7 + $0x8] sm:$0xff] %v156
    // Predicated region
    $region22: #{tpu_custom_call.1} parent=1 // pred_check
      _
    $region23: #{tpu_custom_call.1} parent=1 // pred_check_branch
      %162 = sbr.rel (0) target = $region25
    $region24: #{tpu_custom_call.1} parent=1 // pred_region
      %s164 = ssub.s32 256, 256
      %165 = vsyncadd [#allocation4], %s164
      %s166 = sshll.u32 [#allocation7], 4
      %s167 = int_to_ptr.vmem [resolvable:$true] %s166
      %172 = dma.vmem_to_hbm [thread:$0]  %s167, 256, %s3, [#allocation4], 128, 128, 8
    $region25: #{tpu_custom_call.1} parent=1 // pred_fallthru
      _
    // Predicated region
    $region26: #{tpu_custom_call.1} parent=1 // pred_check
      _
    $region27: #{tpu_custom_call.1} parent=1 // pred_check_branch
      %174 = sbr.rel (0) target = $region29
    $region28: #{tpu_custom_call.1} parent=1 // pred_region
      %175 = dma.done [#allocation4], 256
    $region29: #{tpu_custom_call.1} parent=1 // pred_fallthru
      _
    %176 = vsyncpa [#allocation3], 1
    %177 = vsyncpa [#allocation6], 1
    %178 = vsyncpa [#allocation4], 1

</llo_original>
